<compile_context>
chip_gen: v7x
topology: tpu7x:2x2x1
jax: 0.10.0
libtpu: 0.0.40
codegen_flags: <defaults>
</compile_context>

<pallas_src>
import jax
import jax.numpy as jnp
from jax.experimental import pallas as pl
from jax.experimental.pallas import tpu as pltpu


# Below this many detections (~1.7 MiB of total HBM traffic) pallas_call launch overhead
# dominates; dispatch to a single fused XLA gather instead.
_PALLAS_MIN_DETECTIONS = 32768
# Default lane-axis block.  Per grid step the double-buffered in+out VMEM footprint is
# 2 * (7 + 6) * 4 * block_n bytes (~6.5 MiB at 65536): inside the scoped VMEM defaults of
# v5e (16 MiB) and v6e/v7x (32 MiB), while each block is large enough that the ~0.35 us
# per-grid-step overhead is <10% of the DMA time on every generation (incl. v7x 3.2 TB/s).
_DEFAULT_BLOCK_N = 65536


def _detect_permute_kernel(pred_ref, out_ref):
    """Detection-field permutation in lane-dense (fields-on-sublanes) layout.

    pred_ref: [7, bn]  rows = [batch_id, x1, y1, x2, y2, cls, score]
    out_ref:  [6, bn]  rows = [x1, y1, x2, y2, score, cls]

    Pure sublane row copies, full lane width.  The 6-row output tile occupies 6 of the 8
    sublanes of a vreg tile, so stores are sublane-masked regardless of how the
    permutation is expressed; the kernel is DMA-bound, so three sliced stores are kept.
    """
    out_ref[0:4, :] = pred_ref[1:5, :]   # box  (x1, y1, x2, y2)
    out_ref[4:5, :] = pred_ref[6:7, :]   # score
    out_ref[5:6, :] = pred_ref[5:6, :]   # cls


def detect_postprocess_pallas(pred_fields, *, block_n=_DEFAULT_BLOCK_N,
                              min_pallas_n=_PALLAS_MIN_DETECTIONS):
    """Detection post-processing stage of the Detect head.

    pred_fields: [1, 7, N] fields-first detections
                 (rows = [batch_id, x1, y1, x2, y2, cls, score]).
    returns:     [] if N == 0, else a 1-element list with a fields-first [6, N] array
                 whose rows are [x1, y1, x2, y2, score, cls] (detections on the lane axis;
                 transposing to [N, 6] is deliberately left to the consumer / next fused op).
    """
    n = pred_fields.shape[-1]
    if n == 0:
        return []

    if n < min_pallas_n:
        # Small work: a single fused XLA gather beats pallas_call fixed overhead.
        p = pred_fields[0]                                      # [7, N]
        return [p[jnp.array([1, 2, 3, 4, 6, 5], dtype=jnp.int32)]]  # [6, N]

    # Round a caller-supplied block to a multiple of 128 lanes (>= 128) so it can never
    # violate the (8,128) BlockSpec rule.
    block_n = max(128, (block_n // 128) * 128)

    if n <= block_n:
        # Single full-extent lane block: block last dim == N (full array dim) satisfies
        # the (8,128) rule with no padding at all, even when N is not a multiple of 128.
        bn = n
        grid = (1,)
    else:
        # 128-aligned lane tiles; the last block may be partial — Pallas masks the
        # out-of-bounds lanes on writeback, so no pre-pad pass and no garbage traffic.
        bn = block_n
        grid = (pl.cdiv(n, bn),)

    out = pl.pallas_call(
        _detect_permute_kernel,
        out_shape=jax.ShapeDtypeStruct((6, n), pred_fields.dtype),
        grid=grid,
        # Leading batch dim squeezed inside the BlockSpec (no wrapper-side pred[0]
        # slice -> no extra HBM copy).  Second-to-last block dims (7 / 6) equal the full
        # array extents, so the (8, 128) rule is satisfied.
        in_specs=[pl.BlockSpec((pl.Squeezed(), 7, bn), lambda i: (0, 0, i))],
        out_specs=pl.BlockSpec((6, bn), lambda i: (0, i)),
        compiler_params=pltpu.CompilerParams(
            dimension_semantics=("parallel",)),
    )(pred_fields)

    return [out]


def _reference_postprocess(pred_fields):
    """Pure-JAX reference of the same field permutation (for correctness checks)."""
    p = pred_fields[0]                                              # [7, N]
    return p[jnp.array([1, 2, 3, 4, 6, 5], dtype=jnp.int32)]        # [6, N]


class TracedModelPallas:
    """JAX/Pallas analog of TracedModel (utils/torch_utils.py)."""

    def __init__(self, stride=32, names=("person", "car"), img_size=(640, 640),
                 num_detections=3000):
        self.stride = stride
        self.names = names
        self.img_size = img_size
        self._num_detections = num_detections
        # TODO(synk): torch.jit.trace(self.model, ...) and the externally-defined Detect
        # head (self.detect_layer = model.model[-1]) load external TorchScript graphs /
        # weights and have no Pallas equivalent; replaced by deterministic stubs below.
        # If the real Detect head emitted fields already ordered [x1,y1,x2,y2,score,cls],
        # the permutation kernel above would be deleted entirely (zero-FLOP layout op).

    def _traced_backbone_stub(self, x):
        """Stands in for `out = self.model(x)` (traced backbone + neck + head convs).

        Produces a deterministic fields-first detection tensor [1, 7, N] with rows
        [batch_id, x1, y1, x2, y2, cls, score].
        """
        n = self._num_detections
        key = jax.random.PRNGKey(0)
        k_box, k_cls, k_score = jax.random.split(key, 3)
        h = jnp.float32(x.shape[-2])
        w = jnp.float32(x.shape[-1])
        batch_id = jnp.zeros((1, n), jnp.float32)
        scale = jnp.array([w, h, w, h], jnp.float32)[:, None]
        box = jax.random.uniform(k_box, (4, n), jnp.float32) * scale
        cls = jnp.floor(jax.random.uniform(k_cls, (1, n), jnp.float32) * len(self.names))
        score = jax.random.uniform(k_score, (1, n), jnp.float32)
        det = jnp.concatenate([batch_id, box, cls, score], axis=0)   # [7, N]
        return det[None]                                             # [1, 7, N]

    def _detect_layer(self, out):
        """Stands in for `out = self.detect_layer(out)`.

        TODO(synk): the Detect head's 1x1 convs, sigmoid and anchor-grid decode use
        external model parameters; the detection-field selection / permutation stage
        is the part implemented here (as the Pallas kernel above).
        """
        return detect_postprocess_pallas(out)

    def forward(self, x, augment=False, profile=False):
        out = self._traced_backbone_stub(x)   # out = self.model(x)
        out = self._detect_layer(out)         # out = self.detect_layer(out)
        return out

    __call__ = forward


if __name__ == "__main__":
    # Small NCHW image input, matching TracedModel's rand_example layout (1, 3, H, W).
    key = jax.random.PRNGKey(0)
    x = jax.random.normal(key, (1, 3, 16, 16), dtype=jnp.float32)

    model = TracedModelPallas(stride=32, names=("person", "car"), num_detections=3000)

    # Forward pass: at realistic detection counts (~3K, ~160 KB of traffic) the dispatcher
    # uses the single fused-XLA-gather path (launch-overhead bound regime).
    out_list = model(x)
    assert isinstance(out_list, list) and len(out_list) == 1
    out_fwd = jax.block_until_ready(out_list[0])

    pred_fields = model._traced_backbone_stub(x)
    ref = jax.block_until_ready(_reference_postprocess(pred_fields))
    assert out_fwd.shape == (6, 3000)
    assert bool(jnp.array_equal(out_fwd, ref))

    # Pallas path, single full-extent lane block (N=3000 is not a multiple of 128:
    # no padding, no wrapper slice/transpose — one HBM pass).
    out_pallas = jax.block_until_ready(
        detect_postprocess_pallas(pred_fields, min_pallas_n=0)[0])
    assert out_pallas.shape == (6, 3000)
    assert bool(jnp.array_equal(out_pallas, ref))

    # Pallas path, tiled grid with a masked partial last block (grid = cdiv(3000,1024) = 3).
    out_tiled = jax.block_until_ready(
        detect_postprocess_pallas(pred_fields, block_n=1024, min_pallas_n=0)[0])
    assert bool(jnp.array_equal(out_tiled, ref))

    print("KERNEL_OK")
</pallas_src>

<mosaic_0001>
module attributes {stable_mosaic.version = 11 : i64} {
  func.func @_detect_permute_kernel(%arg0: i32, %arg1: memref<1x7x3000xf32, #tpu.memory_space<vmem>>, %arg2: memref<6x3000xf32, #tpu.memory_space<vmem>>) attributes {dimension_semantics = [#tpu.dimension_semantics<parallel>], iteration_bounds = array<i64: 1>, scalar_prefetch = 0 : i64, scratch_operands = 0 : i64, tpu.core_type = #tpu.core_type<tc>, window_params = [{transform_indices = @transform_0, window_bounds = array<i64: 1, 7, 3000>}, {transform_indices = @transform_1, window_bounds = array<i64: 6, 3000>}]} {
    %c0 = arith.constant 0 : index
    %c1 = arith.constant 1 : index
    %c0_0 = arith.constant 0 : index
    %0 = vector.load %arg1[%c0, %c1, %c0_0] : memref<1x7x3000xf32, #tpu.memory_space<vmem>>, vector<1x4x3000xf32>
    %1 = vector.shape_cast %0 : vector<1x4x3000xf32> to vector<4x3000xf32>
    %c0_1 = arith.constant 0 : index
    %c0_2 = arith.constant 0 : index
    %2 = vector.load %arg2[%c0_1, %c0_2] : memref<6x3000xf32, #tpu.memory_space<vmem>>, vector<4x3000xf32>
    tpu.vector_store %arg2[%c0_1, %c0_2], %1 {strides = array<i32>} : memref<6x3000xf32, #tpu.memory_space<vmem>>, vector<4x3000xf32>,
    %c0_3 = arith.constant 0 : index
    %c6 = arith.constant 6 : index
    %c0_4 = arith.constant 0 : index
    %3 = vector.load %arg1[%c0_3, %c6, %c0_4] : memref<1x7x3000xf32, #tpu.memory_space<vmem>>, vector<1x1x3000xf32>
    %4 = vector.shape_cast %3 : vector<1x1x3000xf32> to vector<1x3000xf32>
    %c4 = arith.constant 4 : index
    %c0_5 = arith.constant 0 : index
    %5 = vector.load %arg2[%c4, %c0_5] : memref<6x3000xf32, #tpu.memory_space<vmem>>, vector<1x3000xf32>
    tpu.vector_store %arg2[%c4, %c0_5], %4 {strides = array<i32>} : memref<6x3000xf32, #tpu.memory_space<vmem>>, vector<1x3000xf32>,
    %c0_6 = arith.constant 0 : index
    %c5 = arith.constant 5 : index
    %c0_7 = arith.constant 0 : index
    %6 = vector.load %arg1[%c0_6, %c5, %c0_7] : memref<1x7x3000xf32, #tpu.memory_space<vmem>>, vector<1x1x3000xf32>
    %7 = vector.shape_cast %6 : vector<1x1x3000xf32> to vector<1x3000xf32>
    %c5_8 = arith.constant 5 : index
    %c0_9 = arith.constant 0 : index
    %8 = vector.load %arg2[%c5_8, %c0_9] : memref<6x3000xf32, #tpu.memory_space<vmem>>, vector<1x3000xf32>
    tpu.vector_store %arg2[%c5_8, %c0_9], %7 {strides = array<i32>} : memref<6x3000xf32, #tpu.memory_space<vmem>>, vector<1x3000xf32>,
    return
  }
  func.func @transform_0(%arg0: i32) -> (i32, i32, i32) {
    %c0_i32 = arith.constant 0 : i32
    %c0_i32_0 = arith.constant 0 : i32
    %c0_i32_1 = arith.constant 0 : i32
    return %c0_i32, %c0_i32_0, %arg0 : i32, i32, i32
  }
  func.func @transform_1(%arg0: i32) -> (i32, i32) {
    %c0_i32 = arith.constant 0 : i32
    %c0_i32_0 = arith.constant 0 : i32
    return %c0_i32, %arg0 : i32, i32
  }
}

</mosaic_0001>

<llo_original>
// kernel: tpu_custom_call.1
$region0: #{tpu_custom_call.1}
  #allocation0 [shape = 'u32[]', space=smem, size = 0x4, offset = 0x4, fixed_abs, tag = 'smem constant byte address 0x4 - core index']
  #allocation1 [shape = 'u32[144,128]{1,0:T(1,128)}', space=vmem, size = 0x12000, scoped, tag = 'internal scratch']
  %s0 = inlined_call_operand.vmem [shape: f32[1,7,3000], index: 0, kind: input, shape index: {}]
  %s1 = inlined_call_operand.hbm [shape: f32[6,3000], index: 1, kind: output, shape index: {}]
  %s2 = sld [smem:[#allocation0]]
  $region14: #{tpu_custom_call.1} parent=0
    _
  %s4 = ssub.s32 1, %s2
  %s5 = scalar_select 0, %s4, %s2
  $region1: #{tpu_custom_call.1} parent=0
    #allocation2 [shape = 'u8[98304]{0}', space=vmem, size = 0x18000, scoped, tag = 'output window, operand 0, single buffered']
    #allocation3 [shape = 's32[1]{0}', space=sflag, size = 0x4, scoped, tag = 'scoped memory for tpu_custom_call.1']
    %6 = vsyncpa [#allocation3], 0
    // Predicated region
    $region2: #{tpu_custom_call.1} parent=1 // pred_check
      _
    $region3: #{tpu_custom_call.1} parent=1 // pred_check_branch
      %8 = sbr.rel (0) target = $region5
    $region4: #{tpu_custom_call.1} parent=1 // pred_region
      _
    $region5: #{tpu_custom_call.1} parent=1 // pred_fallthru
      _
    %v9 = vld [vmem:[%s0] sm:$0x1e]
    %v10 = vld [vmem:[%s0 + $0x8] sm:$0x1e]
    %v11 = vld [vmem:[%s0 + $0x10] sm:$0x1e]
    %v12 = vld [vmem:[%s0 + $0x18] sm:$0x1e]
    %v13 = vld [vmem:[%s0 + $0x20] sm:$0x1e]
    %v14 = vld [vmem:[%s0 + $0x28] sm:$0x1e]
    %v15 = vld [vmem:[%s0 + $0x30] sm:$0x1e]
    %v16 = vld [vmem:[%s0 + $0x38] sm:$0x1e]
    %v17 = vld [vmem:[%s0 + $0x40] sm:$0x1e]
    %v18 = vld [vmem:[%s0 + $0x48] sm:$0x1e]
    %v19 = vld [vmem:[%s0 + $0x50] sm:$0x1e]
    %v20 = vld [vmem:[%s0 + $0x58] sm:$0x1e]
    %v21 = vld [vmem:[%s0 + $0x60] sm:$0x1e]
    %v22 = vld [vmem:[%s0 + $0x68] sm:$0x1e]
    %v23 = vld [vmem:[%s0 + $0x70] sm:$0x1e]
    %v24 = vld [vmem:[%s0 + $0x78] sm:$0x1e]
    %v25 = vld [vmem:[%s0 + $0x80] sm:$0x1e]
    %v26 = vld [vmem:[%s0 + $0x88] sm:$0x1e]
    %v27 = vld [vmem:[%s0 + $0x90] sm:$0x1e]
    %v28 = vld [vmem:[%s0 + $0x98] sm:$0x1e]
    %v29 = vld [vmem:[%s0 + $0xa0] sm:$0x1e]
    %v30 = vld [vmem:[%s0 + $0xa8] sm:$0x1e]
    %v31 = vld [vmem:[%s0 + $0xb0] sm:$0x1e]
    %v32 = vld [vmem:[%s0 + $0xb8] sm:$0x1e]
    %v57 = vrot.slane %v9, 1
    %v58 = vrot.slane %v10, 1
    %v59 = vrot.slane %v11, 1
    %v60 = vrot.slane %v12, 1
    %v61 = vrot.slane %v13, 1
    %v62 = vrot.slane %v14, 1
    %v63 = vrot.slane %v15, 1
    %v64 = vrot.slane %v16, 1
    %v65 = vrot.slane %v17, 1
    %v66 = vrot.slane %v18, 1
    %v67 = vrot.slane %v19, 1
    %v68 = vrot.slane %v20, 1
    %v69 = vrot.slane %v21, 1
    %v70 = vrot.slane %v22, 1
    %v71 = vrot.slane %v23, 1
    %v72 = vrot.slane %v24, 1
    %v73 = vrot.slane %v25, 1
    %v74 = vrot.slane %v26, 1
    %v75 = vrot.slane %v27, 1
    %v76 = vrot.slane %v28, 1
    %v77 = vrot.slane %v29, 1
    %v78 = vrot.slane %v30, 1
    %v79 = vrot.slane %v31, 1
    %v80 = vrot.slane %v32, 1
    %105 = vst [vmem:[#allocation2] sm:$0xf] %v57
    %106 = vst [vmem:[#allocation2 + $0x8] sm:$0xf] %v58
    %107 = vst [vmem:[#allocation2 + $0x10] sm:$0xf] %v59
    %108 = vst [vmem:[#allocation2 + $0x18] sm:$0xf] %v60
    %109 = vst [vmem:[#allocation2 + $0x20] sm:$0xf] %v61
    %110 = vst [vmem:[#allocation2 + $0x28] sm:$0xf] %v62
    %111 = vst [vmem:[#allocation2 + $0x30] sm:$0xf] %v63
    %112 = vst [vmem:[#allocation2 + $0x38] sm:$0xf] %v64
    %113 = vst [vmem:[#allocation2 + $0x40] sm:$0xf] %v65
    %114 = vst [vmem:[#allocation2 + $0x48] sm:$0xf] %v66
    %115 = vst [vmem:[#allocation2 + $0x50] sm:$0xf] %v67
    %116 = vst [vmem:[#allocation2 + $0x58] sm:$0xf] %v68
    %117 = vst [vmem:[#allocation2 + $0x60] sm:$0xf] %v69
    %118 = vst [vmem:[#allocation2 + $0x68] sm:$0xf] %v70
    %119 = vst [vmem:[#allocation2 + $0x70] sm:$0xf] %v71
    %120 = vst [vmem:[#allocation2 + $0x78] sm:$0xf] %v72
    %121 = vst [vmem:[#allocation2 + $0x80] sm:$0xf] %v73
    %122 = vst [vmem:[#allocation2 + $0x88] sm:$0xf] %v74
    %123 = vst [vmem:[#allocation2 + $0x90] sm:$0xf] %v75
    %124 = vst [vmem:[#allocation2 + $0x98] sm:$0xf] %v76
    %125 = vst [vmem:[#allocation2 + $0xa0] sm:$0xf] %v77
    %126 = vst [vmem:[#allocation2 + $0xa8] sm:$0xf] %v78
    %127 = vst [vmem:[#allocation2 + $0xb0] sm:$0xf] %v79
    %vm128 = vcmask 453632
    %129 = vst.msk [vmem:[#allocation2 + $0xb8] sm:$0xf] %vm128, %v80
    %s130 = scalar_lea.vmem %s0, 6
    %v131 = vld [vmem:[%s130] ss:$8 sm:$0xf]
    %v132 = vld [vmem:[%s130] ss:$8 sm:$0xf0]
    %v133 = vor.u32 %v131, %v132
    %s134 = scalar_lea.vmem %s0, 70
    %v135 = vld [vmem:[%s134] ss:$8 sm:$0xf]
    %v136 = vld [vmem:[%s134] ss:$8 sm:$0xf0]
    %v137 = vor.u32 %v135, %v136
    %s138 = scalar_lea.vmem %s0, 134
    %v139 = vld [vmem:[%s138] ss:$8 sm:$0xf]
    %v140 = vld [vmem:[%s138] ss:$8 sm:$0xf0]
    %v141 = vor.u32 %v139, %v140
    %s142 = scalar_lea.vmem [#allocation2], 4
    %143 = vst [vmem:[%s142] ss:$8 sm:$0xf] %v133
    %144 = vst [vmem:[%s142] ss:$8 sm:$0xf0] %v133
    %s145 = scalar_lea.vmem [#allocation2], 68
    %146 = vst [vmem:[%s145] ss:$8 sm:$0xf] %v137
    %147 = vst [vmem:[%s145] ss:$8 sm:$0xf0] %v137
    %v148 = vlaneseq
    %vm149 = vcmp.ge.s32.totalorder %v148, 0
    %vm150 = vcmp.lt.s32.totalorder %v148, 952
    %vm151 = vmand %vm149, %vm150
    %s152 = scalar_lea.vmem [#allocation2], 132
    %153 = vst.msk [vmem:[%s152] ss:$8 sm:$0xf] %vm151, %v141
    %154 = vst.msk [vmem:[%s152] ss:$8 sm:$0xf0] %vm151, %v141
    %s155 = scalar_lea.vmem %s0, 5
    %v156 = vld [vmem:[%s155] ss:$8 sm:$0xf]
    %v157 = vld [vmem:[%s155] ss:$8 sm:$0xf0]
    %v158 = vor.u32 %v156, %v157
    %s159 = scalar_lea.vmem %s0, 69
    %v160 = vld [vmem:[%s159] ss:$8 sm:$0xf]
    %v161 = vld [vmem:[%s159] ss:$8 sm:$0xf0]
    %v162 = vor.u32 %v160, %v161
    %s163 = scalar_lea.vmem %s0, 133
    %v164 = vld [vmem:[%s163] ss:$8 sm:$0xf]
    %v165 = vld [vmem:[%s163] ss:$8 sm:$0xf0]
    %v166 = vor.u32 %v164, %v165
    %s167 = scalar_lea.vmem [#allocation2], 5
    %168 = vst [vmem:[%s167] ss:$8 sm:$0xf] %v158
    %169 = vst [vmem:[%s167] ss:$8 sm:$0xf0] %v158
    %s170 = scalar_lea.vmem [#allocation2], 69
    %171 = vst [vmem:[%s170] ss:$8 sm:$0xf] %v162
    %172 = vst [vmem:[%s170] ss:$8 sm:$0xf0] %v162
    %s173 = scalar_lea.vmem [#allocation2], 133
    %174 = vst.msk [vmem:[%s173] ss:$8 sm:$0xf] %vm151, %v166
    %175 = vst.msk [vmem:[%s173] ss:$8 sm:$0xf0] %vm151, %v166
    // Predicated region
    $region6: #{tpu_custom_call.1} parent=1 // pred_check
      _
    $region7: #{tpu_custom_call.1} parent=1 // pred_check_branch
      %177 = sbr.rel (0) target = $region9
    $region8: #{tpu_custom_call.1} parent=1 // pred_region
      %s179 = ssub.s32 3072, 3072
      %180 = vsyncadd [#allocation3], %s179
      %s182 = sshll.u32 [#allocation2], 4
      %s183 = int_to_ptr.vmem [resolvable:$true] %s182
      %185 = dma.vmem_to_hbm [thread:$0]  %s183, 3072, %s1, [#allocation3]
    $region9: #{tpu_custom_call.1} parent=1 // pred_fallthru
      _
    // Predicated region
    $region10: #{tpu_custom_call.1} parent=1 // pred_check
      _
    $region11: #{tpu_custom_call.1} parent=1 // pred_check_branch
      %187 = sbr.rel (0) target = $region13
    $region12: #{tpu_custom_call.1} parent=1 // pred_region
      %188 = dma.done [#allocation3], 3072
    $region13: #{tpu_custom_call.1} parent=1 // pred_fallthru
      _
    %189 = vsyncpa [#allocation3], 1

</llo_original>
